<compile_context>
chip_gen: v6e
topology: v6e:2x2x1
jax: 0.10.0
libtpu: 0.0.40
codegen_flags: <defaults>
</compile_context>

<pallas_src>
import functools

import jax
import jax.numpy as jnp
from jax import lax
from jax.experimental import pallas as pl
from jax.experimental.pallas import tpu as pltpu

EPS = 1e-6


def _deit_embed_kernel(patches_ref, w_ref, pack_ref, pos_ref, o_ref, *, bt, n):
    # patches_ref: (Bt*N, K) bf16      w_ref: (K, E) bf16
    # pack_ref:    (4, E) f32  rows = [conv_bias, ln_w, ln_b, cls_token + pos0]
    # pos_ref:     (N, E) f32  (positional rows 1..N)
    # o_ref:       (Bt, N+1, E) f32
    e = o_ref.shape[-1]

    z = jnp.dot(patches_ref[...], w_ref[...],
                preferred_element_type=jnp.float32)              # (Bt*N, E) f32
    z = z + pack_ref[0:1, :]                                     # conv bias

    # LayerNorm over E (biased variance, eps inside rsqrt), all in f32.
    mean = jnp.mean(z, axis=-1, keepdims=True)
    centered = z - mean
    var = jnp.mean(centered * centered, axis=-1, keepdims=True)
    zn = centered * lax.rsqrt(var + EPS)
    zn = zn * pack_ref[1:2, :] + pack_ref[2:3, :]                # LN affine

    # CLS rows for all Bt images in one store; patch rows in one store.
    cls_rows = jnp.broadcast_to(pack_ref[3:4, :][None, :, :], (bt, 1, e))
    o_ref[:, 0:1, :] = cls_rows.astype(o_ref.dtype)
    patch_rows = zn.reshape(bt, n, e) + pos_ref[...][None, :, :]
    o_ref[:, 1:, :] = patch_rows.astype(o_ref.dtype)


def _pick_batch_tile(batch, n_rows, max_rows=1024):
    """Largest divisor Bt of `batch` keeping the per-step matmul M-dim at or
    below `max_rows` and (when possible) sublane-aligned."""
    for bt in range(batch, 0, -1):
        if batch % bt:
            continue
        rows = bt * n_rows
        if rows <= max_rows and (rows % 8 == 0 or bt == batch):
            return bt
    return 1


def prepare_params(params, *, patch_dim):
    """One-time parameter preparation (outside the per-call hot path)."""
    conv_w = params["conv_w"]                                    # (E, C, p, p)
    E = conv_w.shape[0]
    K = conv_w.shape[1] * patch_dim * patch_dim
    pos = params["pos_embeddings"].reshape(-1, E)                # (N+1, E)
    w = conv_w.reshape(E, K).T.astype(jnp.bfloat16)              # (K, E)
    cls_row = params["cls_token"].reshape(1, E) + pos[0:1]       # cls + pos[0]
    pack = jnp.concatenate(
        [params["conv_b"].reshape(1, E),
         params["ln_w"].reshape(1, E),
         params["ln_b"].reshape(1, E),
         cls_row], axis=0).astype(jnp.float32)                   # (4, E)
    return {"w": w, "pack": pack, "pos_patch": pos[1:].astype(jnp.float32)}


@functools.partial(jax.jit, static_argnames=("patch_dim",))
def deit_embedding(pixel_values, w, pack, pos_patch, *, patch_dim):
    """pixel_values: [B, C, H, W] f32 -> [B, N+1, E] f32."""
    B, C, H, W = pixel_values.shape
    p = patch_dim
    nph, npw = H // p, W // p
    N = nph * npw
    K, E = w.shape
    assert pos_patch.shape == (N, E)

    # im2col: NCHW -> (B*N, K) with (C, kh, kw) flattening order to match the
    # pre-transposed Conv2d weight; cast to bf16 for the MXU.
    # TODO(synk): fold this patchify into the kernel (strided DMA of p-row
    # strips from an HBM-resident image) to drop the extra HBM round trip.
    x = pixel_values.reshape(B, C, nph, p, npw, p)
    x = jnp.transpose(x, (0, 2, 4, 1, 3, 5))                     # B,nph,npw,C,p,p
    patches = x.reshape(B * N, K).astype(jnp.bfloat16)

    Bt = _pick_batch_tile(B, N)
    grid = (B // Bt,)
    kernel = functools.partial(_deit_embed_kernel, bt=Bt, n=N)

    grid_spec = pltpu.PrefetchScalarGridSpec(
        num_scalar_prefetch=0,
        grid=grid,
        in_specs=[
            pl.BlockSpec((Bt * N, K), lambda b: (b, 0)),         # patch rows
            pl.BlockSpec((K, E), lambda b: (0, 0)),              # proj weight
            pl.BlockSpec((4, E), lambda b: (0, 0)),              # bias/LN/CLS
            pl.BlockSpec((N, E), lambda b: (0, 0)),              # pos rows 1..N
        ],
        out_specs=pl.BlockSpec((Bt, N + 1, E), lambda b: (b, 0, 0)),
    )

    return pl.pallas_call(
        kernel,
        out_shape=jax.ShapeDtypeStruct((B, N + 1, E), jnp.float32),
        grid_spec=grid_spec,
        compiler_params=pltpu.CompilerParams(
            dimension_semantics=("parallel",)),
    )(patches, w, pack, pos_patch)


def deit_embedding_ref(pixel_values, params, *, patch_dim):
    """Pure-JAX reference mirroring the PyTorch forward."""
    B, C, H, W = pixel_values.shape
    p = patch_dim
    E = params["conv_w"].shape[0]
    z = lax.conv_general_dilated(
        pixel_values, params["conv_w"], window_strides=(p, p), padding="VALID",
        dimension_numbers=("NCHW", "OIHW", "NCHW"))              # [B,E,h,w]
    z = z + params["conv_b"].reshape(1, E, 1, 1)
    z = z.reshape(B, E, -1).transpose(0, 2, 1)                   # [B,N,E]
    mean = z.mean(-1, keepdims=True)
    var = ((z - mean) ** 2).mean(-1, keepdims=True)
    z = (z - mean) / jnp.sqrt(var + EPS)
    z = z * params["ln_w"] + params["ln_b"]
    cls = jnp.broadcast_to(params["cls_token"], (B, 1, E))
    z = jnp.concatenate([cls, z], axis=1)
    return z + params["pos_embeddings"]


if __name__ == "__main__":
    # Small config: img_dim=16, patch_dim=4, in_channels=3, embed_dim=128
    # (E=128 keeps the output lane-dense).
    img_dim, patch_dim, in_channels, embed_dim = 16, 4, 3, 128
    batch = 2
    num_patches = (img_dim // patch_dim) ** 2

    key = jax.random.PRNGKey(0)
    k_pix, k_w, k_b, k_lnw, k_lnb, k_cls, k_pos = jax.random.split(key, 7)

    pixel_values = jax.random.normal(
        k_pix, (batch, in_channels, img_dim, img_dim), dtype=jnp.float32)

    # Deterministic synthetic parameters (shapes from the module __init__).
    params = {
        "conv_w": 0.05 * jax.random.normal(
            k_w, (embed_dim, in_channels, patch_dim, patch_dim), jnp.float32),
        "conv_b": 0.05 * jax.random.normal(k_b, (embed_dim,), jnp.float32),
        "ln_w": 1.0 + 0.05 * jax.random.normal(k_lnw, (embed_dim,), jnp.float32),
        "ln_b": 0.05 * jax.random.normal(k_lnb, (embed_dim,), jnp.float32),
        "cls_token": 0.05 * jax.random.normal(
            k_cls, (1, 1, embed_dim), jnp.float32),
        "pos_embeddings": 0.05 * jax.random.normal(
            k_pos, (1, num_patches + 1, embed_dim), jnp.float32),
    }

    prepped = prepare_params(params, patch_dim=patch_dim)
    out = deit_embedding(pixel_values, prepped["w"], prepped["pack"],
                         prepped["pos_patch"], patch_dim=patch_dim)
    out = jax.block_until_ready(out)

    ref = deit_embedding_ref(pixel_values, params, patch_dim=patch_dim)
    assert out.shape == (batch, num_patches + 1, embed_dim)
    # bf16 MXU operands -> loosened tolerance vs. the pure-f32 reference.
    assert jnp.allclose(out, ref, atol=5e-2, rtol=5e-2), "mismatch vs reference"

    print("KERNEL_OK")
</pallas_src>

<mosaic_0001>
module attributes {stable_mosaic.version = 11 : i64} {
  func.func @_deit_embed_kernel(%arg0: i32, %arg1: memref<32x48xbf16, #tpu.memory_space<vmem>>, %arg2: memref<48x128xbf16, #tpu.memory_space<vmem>>, %arg3: memref<4x128xf32, #tpu.memory_space<vmem>>, %arg4: memref<16x128xf32, #tpu.memory_space<vmem>>, %arg5: memref<2x17x128xf32, #tpu.memory_space<vmem>>) attributes {dimension_semantics = [#tpu.dimension_semantics<parallel>], iteration_bounds = array<i64: 1>, scalar_prefetch = 0 : i64, scratch_operands = 0 : i64, tpu.core_type = #tpu.core_type<tc>, window_params = [{transform_indices = @transform_0, window_bounds = array<i64: 32, 48>}, {pipeline_mode = #tpu.pipeline_mode<synchronous>, transform_indices = @transform_1, window_bounds = array<i64: 48, 128>}, {pipeline_mode = #tpu.pipeline_mode<synchronous>, transform_indices = @transform_2, window_bounds = array<i64: 4, 128>}, {pipeline_mode = #tpu.pipeline_mode<synchronous>, transform_indices = @transform_3, window_bounds = array<i64: 16, 128>}, {transform_indices = @transform_4, window_bounds = array<i64: 2, 17, 128>}]} {
    %c0 = arith.constant 0 : index
    %c0_0 = arith.constant 0 : index
    %0 = vector.load %arg1[%c0, %c0_0] : memref<32x48xbf16, #tpu.memory_space<vmem>>, vector<32x48xbf16>
    %c0_1 = arith.constant 0 : index
    %c0_2 = arith.constant 0 : index
    %1 = vector.load %arg2[%c0_1, %c0_2] : memref<48x128xbf16, #tpu.memory_space<vmem>>, vector<48x128xbf16>
    %cst = arith.constant dense<0.000000e+00> : vector<32x128xf32>
    %2 = tpu.matmul %0, %1, %cst {dimension_numbers = #tpu.dot_dimension_numbers<[1], [0], [0], [1], [0, 0, 1, 1], [], []>} : vector<32x48xbf16>, vector<48x128xbf16>, vector<32x128xf32> -> vector<32x128xf32>
    %c0_3 = arith.constant 0 : index
    %c0_4 = arith.constant 0 : index
    %3 = vector.load %arg3[%c0_3, %c0_4] : memref<4x128xf32, #tpu.memory_space<vmem>>, vector<1x128xf32>
    %4 = vector.broadcast %3 : vector<1x128xf32> to vector<32x128xf32>
    %5 = arith.addf %2, %4 : vector<32x128xf32>
    %cst_5 = arith.constant dense<0.000000e+00> : vector<32xf32>
    %6 = vector.multi_reduction <add>, %5, %cst_5 [1] : vector<32x128xf32> to vector<32xf32>
    %7 = vector.shape_cast %6 : vector<32xf32> to vector<32x1xf32>
    %cst_6 = arith.constant 1.280000e+02 : f32
    %8 = vector.broadcast %cst_6 : f32 to vector<32x1xf32>
    %9 = arith.divf %7, %8 : vector<32x1xf32>
    %10 = vector.broadcast %9 : vector<32x1xf32> to vector<32x128xf32>
    %11 = arith.subf %5, %10 : vector<32x128xf32>
    %12 = arith.mulf %11, %11 : vector<32x128xf32>
    %cst_7 = arith.constant dense<0.000000e+00> : vector<32xf32>
    %13 = vector.multi_reduction <add>, %12, %cst_7 [1] : vector<32x128xf32> to vector<32xf32>
    %14 = vector.shape_cast %13 : vector<32xf32> to vector<32x1xf32>
    %cst_8 = arith.constant 1.280000e+02 : f32
    %15 = vector.broadcast %cst_8 : f32 to vector<32x1xf32>
    %16 = arith.divf %14, %15 : vector<32x1xf32>
    %cst_9 = arith.constant 9.99999997E-7 : f32
    %17 = vector.broadcast %cst_9 : f32 to vector<32x1xf32>
    %18 = arith.addf %16, %17 : vector<32x1xf32>
    %19 = math.rsqrt %18 : vector<32x1xf32>
    %20 = vector.broadcast %19 : vector<32x1xf32> to vector<32x128xf32>
    %21 = arith.mulf %11, %20 : vector<32x128xf32>
    %c1 = arith.constant 1 : index
    %c0_10 = arith.constant 0 : index
    %22 = vector.load %arg3[%c1, %c0_10] : memref<4x128xf32, #tpu.memory_space<vmem>>, vector<1x128xf32>
    %23 = vector.broadcast %22 : vector<1x128xf32> to vector<32x128xf32>
    %24 = arith.mulf %21, %23 : vector<32x128xf32>
    %c2 = arith.constant 2 : index
    %c0_11 = arith.constant 0 : index
    %25 = vector.load %arg3[%c2, %c0_11] : memref<4x128xf32, #tpu.memory_space<vmem>>, vector<1x128xf32>
    %26 = vector.broadcast %25 : vector<1x128xf32> to vector<32x128xf32>
    %27 = arith.addf %24, %26 : vector<32x128xf32>
    %c3 = arith.constant 3 : index
    %c0_12 = arith.constant 0 : index
    %28 = vector.load %arg3[%c3, %c0_12] : memref<4x128xf32, #tpu.memory_space<vmem>>, vector<1x128xf32>
    %29 = vector.shape_cast %28 : vector<1x128xf32> to vector<1x1x128xf32>
    %30 = vector.shape_cast %29 : vector<1x1x128xf32> to vector<1x1x128xf32>
    %31 = vector.broadcast %30 : vector<1x1x128xf32> to vector<2x1x128xf32>
    %c0_13 = arith.constant 0 : index
    %c0_14 = arith.constant 0 : index
    %c0_15 = arith.constant 0 : index
    %32 = vector.load %arg5[%c0_13, %c0_14, %c0_15] : memref<2x17x128xf32, #tpu.memory_space<vmem>>, vector<2x1x128xf32>
    tpu.vector_store %arg5[%c0_13, %c0_14, %c0_15], %31 {strides = array<i32>} : memref<2x17x128xf32, #tpu.memory_space<vmem>>, vector<2x1x128xf32>,
    %33 = vector.shape_cast %27 : vector<32x128xf32> to vector<2x16x128xf32>
    %c0_16 = arith.constant 0 : index
    %c0_17 = arith.constant 0 : index
    %34 = vector.load %arg4[%c0_16, %c0_17] : memref<16x128xf32, #tpu.memory_space<vmem>>, vector<16x128xf32>
    %35 = vector.shape_cast %34 : vector<16x128xf32> to vector<1x16x128xf32>
    %36 = vector.broadcast %35 : vector<1x16x128xf32> to vector<2x16x128xf32>
    %37 = arith.addf %33, %36 : vector<2x16x128xf32>
    %c0_18 = arith.constant 0 : index
    %c1_19 = arith.constant 1 : index
    %c0_20 = arith.constant 0 : index
    %38 = vector.load %arg5[%c0_18, %c1_19, %c0_20] : memref<2x17x128xf32, #tpu.memory_space<vmem>>, vector<2x16x128xf32>
    tpu.vector_store %arg5[%c0_18, %c1_19, %c0_20], %37 {strides = array<i32>} : memref<2x17x128xf32, #tpu.memory_space<vmem>>, vector<2x16x128xf32>,
    return
  }
  func.func @transform_0(%arg0: i32) -> (i32, i32) {
    %c0_i32 = arith.constant 0 : i32
    %c0_i32_0 = arith.constant 0 : i32
    return %arg0, %c0_i32 : i32, i32
  }
  func.func @transform_1(%arg0: i32) -> (i32, i32) {
    %c0_i32 = arith.constant 0 : i32
    %c0_i32_0 = arith.constant 0 : i32
    %c0_i32_1 = arith.constant 0 : i32
    return %c0_i32, %c0_i32_0 : i32, i32
  }
  func.func @transform_2(%arg0: i32) -> (i32, i32) {
    %c0_i32 = arith.constant 0 : i32
    %c0_i32_0 = arith.constant 0 : i32
    %c0_i32_1 = arith.constant 0 : i32
    return %c0_i32, %c0_i32_0 : i32, i32
  }
  func.func @transform_3(%arg0: i32) -> (i32, i32) {
    %c0_i32 = arith.constant 0 : i32
    %c0_i32_0 = arith.constant 0 : i32
    %c0_i32_1 = arith.constant 0 : i32
    return %c0_i32, %c0_i32_0 : i32, i32
  }
  func.func @transform_4(%arg0: i32) -> (i32, i32, i32) {
    %c0_i32 = arith.constant 0 : i32
    %c0_i32_0 = arith.constant 0 : i32
    %c0_i32_1 = arith.constant 0 : i32
    return %arg0, %c0_i32, %c0_i32_0 : i32, i32, i32
  }
}

</mosaic_0001>

<llo_original>
// kernel: deit_embedding.1
$region0: #{deit_embedding.1}
  #allocation0 [shape = 'u32[]', space=smem, size = 0x4, offset = 0x4, fixed_abs, tag = 'smem constant byte address 0x4 - core index']
  #allocation1 [shape = 'u32[144,128]{1,0:T(1,128)}', space=vmem, size = 0x12000, scoped, tag = 'internal scratch']
  %s0 = inlined_call_operand.vmem [shape: bf16[32,48], index: 0, kind: input, shape index: {}]
  %s1 = inlined_call_operand.vmem [shape: bf16[48,128], index: 1, kind: input, shape index: {}]
  %s2 = inlined_call_operand.vmem [shape: f32[4,128], index: 2, kind: input, shape index: {}]
  %s3 = inlined_call_operand.vmem [shape: f32[16,128], index: 3, kind: input, shape index: {}]
  %s4 = inlined_call_operand.vmem [shape: f32[2,17,128], index: 4, kind: output, shape index: {}]
  %s5 = sld [smem:[#allocation0]]
  $region26: #{deit_embedding.1} parent=0
    _
  %s7 = ssub.s32 1, %s5
  %s8 = scalar_select 0, %s7, %s5
  // Predicated region
  $region2: #{deit_embedding.1} parent=0 // pred_check
    _
  $region3: #{deit_embedding.1} parent=0 // pred_check_branch
    %10 = sbr.rel (0) target = $region5
  $region4: #{deit_embedding.1} parent=0 // pred_region
    _
  $region5: #{deit_embedding.1} parent=0 // pred_fallthru
    _
  // Predicated region
  $region6: #{deit_embedding.1} parent=0 // pred_check
    _
  $region7: #{deit_embedding.1} parent=0 // pred_check_branch
    %12 = sbr.rel (0) target = $region9
  $region8: #{deit_embedding.1} parent=0 // pred_region
    _
  $region9: #{deit_embedding.1} parent=0 // pred_fallthru
    _
  // Predicated region
  $region10: #{deit_embedding.1} parent=0 // pred_check
    _
  $region11: #{deit_embedding.1} parent=0 // pred_check_branch
    %14 = sbr.rel (0) target = $region13
  $region12: #{deit_embedding.1} parent=0 // pred_region
    _
  $region13: #{deit_embedding.1} parent=0 // pred_fallthru
    _
  // Predicated region
  $region14: #{deit_embedding.1} parent=0 // pred_check
    _
  $region15: #{deit_embedding.1} parent=0 // pred_check_branch
    %16 = sbr.rel (0) target = $region17
  $region16: #{deit_embedding.1} parent=0 // pred_region
    _
  $region17: #{deit_embedding.1} parent=0 // pred_fallthru
    _
  %v18 = vld [vmem:[%s0] sm:$0xf]
  %v19 = vld [vmem:[%s0 + $0x4] sm:$0xf]
  %v20 = vld [vmem:[%s0 + $0x8] sm:$0xf]
  %v21 = vld [vmem:[%s0 + $0xc] sm:$0xf]
  %v22 = vld [vmem:[%s1] sm:$0xf]
  %v23 = vld [vmem:[%s1 + $0x4] sm:$0xf]
  %v24 = vld [vmem:[%s1 + $0x8] sm:$0xf]
  %v25 = vld [vmem:[%s1 + $0xc] sm:$0xf]
  %v26 = vld [vmem:[%s1 + $0x10] sm:$0xf]
  %v27 = vld [vmem:[%s1 + $0x14] sm:$0xf]
  %v28 = vld [vmem:[%s2] sm:$0x1]
  %v29 = vlaneseq
  %v30 = vshrl.u32 %v29, 7
  %v31 = vsub.s32 0, %v30
  %v32 = vrot.slane %v28, %v31
  %v37 = vunpack.c.l.b16 %v18
  %v38 = vunpack.c.l.b16 %v19
  %v39 = vunpack.c.l.b16 %v20
  %v40 = vunpack.c.l.b16 %v21
  %v41 = vpack.c.b16 %v38, %v37
  %v42 = vpack.c.b16 %v40, %v39
  %v49 = vunpack.c.l.b16 %v22
  %v50 = vunpack.c.l.b16 %v23
  %v51 = vunpack.c.l.b16 %v24
  %v52 = vunpack.c.l.b16 %v25
  %v53 = vunpack.c.l.b16 %v26
  %v54 = vunpack.c.l.b16 %v27
  %v55 = vpack.c.b16 %v50, %v49
  %v56 = vpack.c.b16 %v52, %v51
  %v57 = vpack.c.b16 %v54, %v53
  %vm61 = vcmask 392192
  %v63 = vsel %vm61, %v41, 0
  %v66 = vsel %vm61, %v42, 0
  %68 = vmatprep.subr.bf16.mxu0 0
  %69 = vmatpush1.bf16.msra.mxu0 0
  %70 = vmatprep.subr.bf16.mxu0 0
  %71 = vmatpush1.bf16.msra.mxu0 0
  %72 = vmatprep.subr.bf16.mxu0 0
  %73 = vmatpush1.bf16.msra.mxu0 0
  %74 = vmatprep.subr.bf16.mxu0 0
  %75 = vmatpush1.bf16.msra.mxu0 0
  %76 = vmatprep.subr.bf16.mxu0 0
  %77 = vmatpush1.bf16.msra.mxu0 0
  %78 = vmatprep.subr.bf16.mxu0 0
  %79 = vmatpush1.bf16.msra.mxu0 %v57
  %80 = vmatprep.subr.bf16.mxu0 0
  %81 = vmatpush1.bf16.msra.mxu0 %v56
  %82 = vmatprep.subr.bf16.mxu0 0
  %83 = vmatpush1.bf16.msra.mxu0 %v55
  %84 = vmatprep.subr.bf16.mxu0 0
  %85 = vmatpush2.bf16.msra.mxu0 0
  %86 = vmatprep.subr.bf16.mxu0 0
  %87 = vmatpush2.bf16.msra.mxu0 0
  %88 = vmatprep.subr.bf16.mxu0 0
  %89 = vmatpush2.bf16.msra.mxu0 0
  %90 = vmatprep.subr.bf16.mxu0 0
  %91 = vmatpush2.bf16.msra.mxu0 0
  %92 = vmatprep.subr.bf16.mxu0 0
  %93 = vmatpush2.bf16.msra.mxu0 0
  %94 = vmatprep.subr.bf16.mxu0 0
  %95 = vmatpush2.bf16.msra.mxu0 0
  %96 = vmatprep.subr.bf16.mxu0 0
  %97 = vmatpush2.bf16.msra.mxu0 0
  %98 = vmatprep.subr.bf16.mxu0 0
  %99 = vmatpush2.bf16.msra.mxu0 0
  %100 = vmatprep.mubr.bf16.mxu0 0
  %101 = vmatmul.mubr.bf16.gmra.mxu0 %v63
  %v102 = vpop.f32.mrf.mxu0
  %v103 = vadd.f32 %v32, %v102
  %v104 = vpop.f32.mrf.mxu0
  %v105 = vpop.f32.mrf.mxu0
  %v106 = vadd.f32 %v32, %v105
  %v107 = vpop.f32.mrf.mxu0
  %108 = vmatprep.mubr.bf16.mxu0 0
  %109 = vmatmul.mubr.bf16.gmra.mxu0 %v66
  %v110 = vpop.f32.mrf.mxu0
  %v111 = vadd.f32 %v32, %v110
  %v112 = vpop.f32.mrf.mxu0
  %v113 = vpop.f32.mrf.mxu0
  %v114 = vadd.f32 %v32, %v113
  %v115 = vpop.f32.mrf.mxu0
  %116 = vdwg.mxu0
  %117 = vadd.xlane.f32.xlu0 %v103
  %v118 = vpop.xlane.xlu0 %117
  %119 = vadd.xlane.f32.xlu0 %v106
  %v120 = vpop.xlane.xlu0 %119
  %121 = vadd.xlane.f32.xlu0 %v111
  %v122 = vpop.xlane.xlu0 %121
  %123 = vadd.xlane.f32.xlu0 %v114
  %v124 = vpop.xlane.xlu0 %123
  %v125 = vrcp.pop 128.0
  %v126 = vmul.f32 %v118, %v125
  %v127 = vmul.f32 %v120, %v125
  %v128 = vmul.f32 %v122, %v125
  %v129 = vmul.f32 %v124, %v125
  %v130 = vsub.f32 %v103, %v126
  %v131 = vsub.f32 %v106, %v127
  %v132 = vsub.f32 %v111, %v128
  %v133 = vsub.f32 %v114, %v129
  %v134 = vmul.f32 %v130, %v130
  %v135 = vmul.f32 %v131, %v131
  %v136 = vmul.f32 %v132, %v132
  %v137 = vmul.f32 %v133, %v133
  %138 = vadd.xlane.f32.xlu0 %v134
  %v139 = vpop.xlane.xlu0 %138
  %140 = vadd.xlane.f32.xlu0 %v135
  %v141 = vpop.xlane.xlu0 %140
  %142 = vadd.xlane.f32.xlu0 %v136
  %v143 = vpop.xlane.xlu0 %142
  %144 = vadd.xlane.f32.xlu0 %v137
  %v145 = vpop.xlane.xlu0 %144
  %v146 = vmul.f32 %v139, %v125
  %v147 = vmul.f32 %v141, %v125
  %v148 = vmul.f32 %v143, %v125
  %v149 = vmul.f32 %v145, %v125
  %v150 = vadd.f32 %v146, 1e-06
  %v151 = vadd.f32 %v147, 1e-06
  %v152 = vadd.f32 %v148, 1e-06
  %v153 = vadd.f32 %v149, 1e-06
  %v154 = vrsqrt.pop %v150
  %v155 = vrsqrt.pop %v151
  %v156 = vrsqrt.pop %v152
  %v157 = vrsqrt.pop %v153
  %v158 = vmul.f32 %v130, %v154
  %v159 = vmul.f32 %v131, %v155
  %v160 = vmul.f32 %v132, %v156
  %v161 = vmul.f32 %v133, %v157
  %v162 = vld [vmem:[%s2 + $0x1] sm:$0x1]
  %v163 = vlaneseq
  %v164 = vshrl.u32 %v163, 7
  %v165 = vsub.s32 0, %v164
  %v166 = vrot.slane %v162, %v165
  %v167 = vmul.f32 %v158, %v166
  %v168 = vmul.f32 %v159, %v166
  %v169 = vmul.f32 %v160, %v166
  %v170 = vmul.f32 %v161, %v166
  %v171 = vld [vmem:[%s2 + $0x2] sm:$0x1]
  %v172 = vlaneseq
  %v173 = vshrl.u32 %v172, 7
  %v174 = vsub.s32 0, %v173
  %v175 = vrot.slane %v171, %v174
  %v176 = vadd.f32 %v167, %v175
  %v177 = vadd.f32 %v168, %v175
  %v178 = vadd.f32 %v169, %v175
  %v179 = vadd.f32 %v170, %v175
  %v180 = vld [vmem:[%s2 + $0x3] sm:$0x1]
  %181 = vst [vmem:[%s4] sm:$0x1] %v180
  %182 = vst [vmem:[%s4 + $0x18] sm:$0x1] %v180
  %v183 = vld [vmem:[%s3] sm:$0xff]
  %v184 = vld [vmem:[%s3 + $0x8] sm:$0xff]
  %v185 = vadd.f32 %v176, %v183
  %v186 = vadd.f32 %v177, %v184
  %v187 = vadd.f32 %v178, %v183
  %v188 = vadd.f32 %v179, %v184
  %189 = vst [vmem:[%s4 + $0x1] sm:$0xff] %v185
  %190 = vst [vmem:[%s4 + $0x9] sm:$0xff] %v186
  %191 = vst [vmem:[%s4 + $0x19] sm:$0xff] %v187
  %192 = vst [vmem:[%s4 + $0x21] sm:$0xff] %v188
  // Predicated region
  $region18: #{deit_embedding.1} parent=0 // pred_check
    _
  $region19: #{deit_embedding.1} parent=0 // pred_check_branch
    %194 = sbr.rel (0) target = $region21
  $region20: #{deit_embedding.1} parent=0 // pred_region
    _
  $region21: #{deit_embedding.1} parent=0 // pred_fallthru
    _
  // Predicated region
  $region22: #{deit_embedding.1} parent=0 // pred_check
    _
  $region23: #{deit_embedding.1} parent=0 // pred_check_branch
    %196 = sbr.rel (0) target = $region25
  $region24: #{deit_embedding.1} parent=0 // pred_region
    _
  $region25: #{deit_embedding.1} parent=0 // pred_fallthru
    _

</llo_original>
